<compile_context>
chip_gen: v6e
topology: v6e:2x2x1
jax: 0.10.0
libtpu: 0.0.40
codegen_flags: <defaults>
</compile_context>

<pallas_src>
import jax
import jax.numpy as jnp
from jax.experimental import pallas as pl
from jax.experimental.pallas import tpu as pltpu


def _conv1x1_add_kernel(x_ref, w_ref, b_ref, other_ref, o_ref):
    """One batch image per grid step.

    x_ref:     (Cin,  M)   zero-padded image, channel-major, flattened spatial
    w_ref:     (Cout, Cin) 1x1 conv weight
    b_ref:     (Cout, 1)   bias
    other_ref: (Cout, M)   residual (HBM buffer aliased with o_ref)
    o_ref:     (Cout, M)
    """
    w = w_ref[...]
    # bias + residual first; this is exactly the right value on the
    # zero-padded border pixels (conv contributes only the bias there).
    acc = other_ref[...] + b_ref[...]
    # Cin=4, Cout=8: an MXU pass would be <1% utilized and still pay push/pop
    # latency, so do the contraction as Cin broadcast multiply-accumulates on
    # the VPU (statically unrolled).
    for c in range(w.shape[1]):
        acc = acc + w[:, c:c + 1] * x_ref[c:c + 1, :]
    o_ref[...] = acc.astype(o_ref.dtype)


def conv1x1_pad1_add(x_nchw, other_nchw, weight, bias):
    """Conv2d(Cin->Cout, k=1, stride=1, padding=1)(x) + other, NCHW.

    x_nchw:     (N, Cin, H, W)
    other_nchw: (N, Cout, H+2, W+2)
    weight:     (Cout, Cin, 1, 1)
    bias:       (Cout,)
    returns:    (N, Cout, H+2, W+2) float32
    """
    N, Cin, H, W = x_nchw.shape
    Cout = weight.shape[0]
    Hp, Wp = H + 2, W + 2            # padding=1 with a 1x1 kernel grows the output
    M = Hp * Wp                      # per-image flattened padded spatial axis

    # Zero-pad spatially (the conv padding), then flatten Hp*Wp into the lane
    # axis.  (N, C, Hp, Wp) -> (N, C, Hp*Wp) is a pure reshape for ANY batch
    # size: no transposes / extra HBM passes.
    # TODO(synk): the jnp.pad of x could be fused into the kernel (zeroed VMEM
    # scratch + interior copy); skipped since x is the smallest input and the
    # win is negligible at these sizes.
    x_cm = jnp.pad(x_nchw.astype(jnp.float32),
                   ((0, 0), (0, 0), (1, 1), (1, 1))).reshape(N, Cin, M)
    # Cast guard: the alias below requires `other` to match the f32 output.
    other_cm = other_nchw.astype(jnp.float32).reshape(N, Cout, M)

    w_mat = weight.reshape(Cout, Cin).astype(jnp.float32)   # (Cout, Cin)
    b_mat = bias.reshape(Cout, 1).astype(jnp.float32)       # (Cout, 1)

    # Note: M is not forced to a multiple of 128 here; rounding it up would
    # require an extra full HBM copy of `other` (and a slice of the output),
    # which costs more than the masked trailing store it removes at this size.
    bytes_accessed = 4 * (N * (Cin * M + 2 * Cout * M) + Cout * Cin + Cout)

    out_cm = pl.pallas_call(
        _conv1x1_add_kernel,
        grid=(N,),
        out_shape=jax.ShapeDtypeStruct((N, Cout, M), jnp.float32),
        in_specs=[
            pl.BlockSpec((pl.Squeezed(), Cin, M), lambda n: (n, 0, 0)),    # x
            pl.BlockSpec((Cout, Cin), lambda n: (0, 0)),                   # W
            pl.BlockSpec((Cout, 1), lambda n: (0, 0)),                     # b
            pl.BlockSpec((pl.Squeezed(), Cout, M), lambda n: (n, 0, 0)),   # other
        ],
        out_specs=pl.BlockSpec((pl.Squeezed(), Cout, M), lambda n: (n, 0, 0)),
        input_output_aliases={3: 0},   # reuse `other`'s HBM buffer for the output
        compiler_params=pltpu.CompilerParams(
            dimension_semantics=("parallel",)),  # batch axis -> both TCs on v7x
        cost_estimate=pl.CostEstimate(
            flops=2 * N * Cout * Cin * M,
            transcendentals=0,
            bytes_accessed=bytes_accessed),
    )(x_cm, w_mat, b_mat, other_cm)

    return out_cm.reshape(N, Cout, Hp, Wp)


# Donate `other` so the input_output_alias is honored end-to-end (no
# defensive copy of the largest tensor).
_conv1x1_pad1_add_jit = jax.jit(conv1x1_pad1_add, donate_argnums=(1,))


def model_forward(x1, other, padding1, weight, bias):
    # In the original module, the `padding1 is None` branch only creates an
    # unused random tensor; the returned value is always conv(x1) + other,
    # so `padding1` does not affect the output.
    del padding1
    return _conv1x1_pad1_add_jit(x1, other, weight, bias)


if __name__ == "__main__":
    key = jax.random.PRNGKey(0)
    k1, k2, k3, k4 = jax.random.split(key, 4)

    # Small shapes consistent with the module: batch=2, Cin=4, Cout=8, H=W=16.
    N, Cin, Cout, H, W = 2, 4, 8, 16, 16
    Hp, Wp = H + 2, W + 2

    x1 = jax.random.normal(k1, (N, Cin, H, W), dtype=jnp.float32)
    other = jax.random.normal(k2, (N, Cout, Hp, Wp), dtype=jnp.float32)

    # Deterministic Conv2d(4, 8, 1) parameters (kaiming-uniform-ish bounds).
    fan_in = Cin * 1 * 1
    bound = 1.0 / (fan_in ** 0.5)
    weight = jax.random.uniform(k3, (Cout, Cin, 1, 1),
                                minval=-bound, maxval=bound, dtype=jnp.float32)
    bias = jax.random.uniform(k4, (Cout,), minval=-bound, maxval=bound,
                              dtype=jnp.float32)

    # Pure-JAX reference of conv(1x1, pad=1) + add, computed BEFORE the kernel
    # call because `other` is donated to (and overwritten by) the kernel.
    x_pad_ref = jnp.pad(x1, ((0, 0), (0, 0), (1, 1), (1, 1)))
    ref = jnp.einsum("nchw,oc->nohw", x_pad_ref, weight.reshape(Cout, Cin))
    ref = ref + bias.reshape(1, Cout, 1, 1) + other
    ref = jax.block_until_ready(ref)

    out = model_forward(x1, other, 1, weight, bias)
    out = jax.block_until_ready(out)

    assert out.shape == (N, Cout, Hp, Wp)
    assert jnp.allclose(out, ref, atol=1e-5, rtol=1e-5)

    print("KERNEL_OK")
</pallas_src>

<mosaic_0001>
module attributes {stable_mosaic.version = 11 : i64} {
  func.func @_conv1x1_add_kernel(%arg0: i32, %arg1: memref<1x4x324xf32, #tpu.memory_space<vmem>>, %arg2: memref<8x4xf32, #tpu.memory_space<vmem>>, %arg3: memref<8x1xf32, #tpu.memory_space<vmem>>, %arg4: memref<1x8x324xf32, #tpu.memory_space<vmem>>, %arg5: memref<1x8x324xf32, #tpu.memory_space<vmem>>) attributes {dimension_semantics = [#tpu.dimension_semantics<parallel>], iteration_bounds = array<i64: 2>, scalar_prefetch = 0 : i64, scratch_operands = 0 : i64, tpu.core_type = #tpu.core_type<tc>, window_params = [{transform_indices = @transform_0, window_bounds = array<i64: 1, 4, 324>}, {pipeline_mode = #tpu.pipeline_mode<synchronous>, transform_indices = @transform_1, window_bounds = array<i64: 8, 4>}, {pipeline_mode = #tpu.pipeline_mode<synchronous>, transform_indices = @transform_2, window_bounds = array<i64: 8, 1>}, {transform_indices = @transform_3, window_bounds = array<i64: 1, 8, 324>}, {transform_indices = @transform_4, window_bounds = array<i64: 1, 8, 324>}]} {
    %c0 = arith.constant 0 : index
    %c0_0 = arith.constant 0 : index
    %0 = vector.load %arg2[%c0, %c0_0] : memref<8x4xf32, #tpu.memory_space<vmem>>, vector<8x4xf32>
    %c0_1 = arith.constant 0 : index
    %c0_2 = arith.constant 0 : index
    %c0_3 = arith.constant 0 : index
    %1 = vector.load %arg4[%c0_1, %c0_2, %c0_3] : memref<1x8x324xf32, #tpu.memory_space<vmem>>, vector<1x8x324xf32>
    %2 = vector.shape_cast %1 : vector<1x8x324xf32> to vector<8x324xf32>
    %c0_4 = arith.constant 0 : index
    %c0_5 = arith.constant 0 : index
    %3 = vector.load %arg3[%c0_4, %c0_5] : memref<8x1xf32, #tpu.memory_space<vmem>>, vector<8x1xf32>
    %4 = vector.broadcast %3 : vector<8x1xf32> to vector<8x324xf32>
    %5 = arith.addf %2, %4 : vector<8x324xf32>
    %6 = vector.extract_strided_slice %0 {offsets = [0, 0], sizes = [8, 1], strides = [1, 1]} : vector<8x4xf32> to vector<8x1xf32>
    %c0_6 = arith.constant 0 : index
    %c0_7 = arith.constant 0 : index
    %c0_8 = arith.constant 0 : index
    %7 = vector.load %arg1[%c0_6, %c0_7, %c0_8] : memref<1x4x324xf32, #tpu.memory_space<vmem>>, vector<1x1x324xf32>
    %8 = vector.shape_cast %7 : vector<1x1x324xf32> to vector<1x324xf32>
    %9 = vector.broadcast %6 : vector<8x1xf32> to vector<8x324xf32>
    %10 = vector.broadcast %8 : vector<1x324xf32> to vector<8x324xf32>
    %11 = arith.mulf %9, %10 : vector<8x324xf32>
    %12 = arith.addf %5, %11 : vector<8x324xf32>
    %13 = vector.extract_strided_slice %0 {offsets = [0, 1], sizes = [8, 1], strides = [1, 1]} : vector<8x4xf32> to vector<8x1xf32>
    %c0_9 = arith.constant 0 : index
    %c1 = arith.constant 1 : index
    %c0_10 = arith.constant 0 : index
    %14 = vector.load %arg1[%c0_9, %c1, %c0_10] : memref<1x4x324xf32, #tpu.memory_space<vmem>>, vector<1x1x324xf32>
    %15 = vector.shape_cast %14 : vector<1x1x324xf32> to vector<1x324xf32>
    %16 = vector.broadcast %13 : vector<8x1xf32> to vector<8x324xf32>
    %17 = vector.broadcast %15 : vector<1x324xf32> to vector<8x324xf32>
    %18 = arith.mulf %16, %17 : vector<8x324xf32>
    %19 = arith.addf %12, %18 : vector<8x324xf32>
    %20 = vector.extract_strided_slice %0 {offsets = [0, 2], sizes = [8, 1], strides = [1, 1]} : vector<8x4xf32> to vector<8x1xf32>
    %c0_11 = arith.constant 0 : index
    %c2 = arith.constant 2 : index
    %c0_12 = arith.constant 0 : index
    %21 = vector.load %arg1[%c0_11, %c2, %c0_12] : memref<1x4x324xf32, #tpu.memory_space<vmem>>, vector<1x1x324xf32>
    %22 = vector.shape_cast %21 : vector<1x1x324xf32> to vector<1x324xf32>
    %23 = vector.broadcast %20 : vector<8x1xf32> to vector<8x324xf32>
    %24 = vector.broadcast %22 : vector<1x324xf32> to vector<8x324xf32>
    %25 = arith.mulf %23, %24 : vector<8x324xf32>
    %26 = arith.addf %19, %25 : vector<8x324xf32>
    %27 = vector.extract_strided_slice %0 {offsets = [0, 3], sizes = [8, 1], strides = [1, 1]} : vector<8x4xf32> to vector<8x1xf32>
    %c0_13 = arith.constant 0 : index
    %c3 = arith.constant 3 : index
    %c0_14 = arith.constant 0 : index
    %28 = vector.load %arg1[%c0_13, %c3, %c0_14] : memref<1x4x324xf32, #tpu.memory_space<vmem>>, vector<1x1x324xf32>
    %29 = vector.shape_cast %28 : vector<1x1x324xf32> to vector<1x324xf32>
    %30 = vector.broadcast %27 : vector<8x1xf32> to vector<8x324xf32>
    %31 = vector.broadcast %29 : vector<1x324xf32> to vector<8x324xf32>
    %32 = arith.mulf %30, %31 : vector<8x324xf32>
    %33 = arith.addf %26, %32 : vector<8x324xf32>
    %c0_15 = arith.constant 0 : index
    %c0_16 = arith.constant 0 : index
    %c0_17 = arith.constant 0 : index
    %34 = vector.load %arg5[%c0_15, %c0_16, %c0_17] : memref<1x8x324xf32, #tpu.memory_space<vmem>>, vector<1x8x324xf32>
    %35 = vector.shape_cast %34 : vector<1x8x324xf32> to vector<8x324xf32>
    %36 = vector.shape_cast %33 : vector<8x324xf32> to vector<1x8x324xf32>
    tpu.vector_store %arg5[%c0_15, %c0_16, %c0_17], %36 {strides = array<i32>} : memref<1x8x324xf32, #tpu.memory_space<vmem>>, vector<1x8x324xf32>,
    return
  }
  func.func @transform_0(%arg0: i32) -> (i32, i32, i32) {
    %c0_i32 = arith.constant 0 : i32
    %c0_i32_0 = arith.constant 0 : i32
    %c0_i32_1 = arith.constant 0 : i32
    return %arg0, %c0_i32, %c0_i32_0 : i32, i32, i32
  }
  func.func @transform_1(%arg0: i32) -> (i32, i32) {
    %c0_i32 = arith.constant 0 : i32
    %c0_i32_0 = arith.constant 0 : i32
    %c0_i32_1 = arith.constant 0 : i32
    return %c0_i32, %c0_i32_0 : i32, i32
  }
  func.func @transform_2(%arg0: i32) -> (i32, i32) {
    %c0_i32 = arith.constant 0 : i32
    %c0_i32_0 = arith.constant 0 : i32
    %c0_i32_1 = arith.constant 0 : i32
    return %c0_i32, %c0_i32_0 : i32, i32
  }
  func.func @transform_3(%arg0: i32) -> (i32, i32, i32) {
    %c0_i32 = arith.constant 0 : i32
    %c0_i32_0 = arith.constant 0 : i32
    %c0_i32_1 = arith.constant 0 : i32
    return %arg0, %c0_i32, %c0_i32_0 : i32, i32, i32
  }
  func.func @transform_4(%arg0: i32) -> (i32, i32, i32) {
    %c0_i32 = arith.constant 0 : i32
    %c0_i32_0 = arith.constant 0 : i32
    %c0_i32_1 = arith.constant 0 : i32
    return %arg0, %c0_i32, %c0_i32_0 : i32, i32, i32
  }
}

</mosaic_0001>

<llo_original>
// kernel: conv1x1_pad1_add.1
$region0: #{conv1x1_pad1_add.1}
  #allocation0 [shape = 'u32[]', space=smem, size = 0x4, offset = 0x4, fixed_abs, tag = 'smem constant byte address 0x4 - core index']
  #allocation1 [shape = 'u32[144,128]{1,0:T(1,128)}', space=vmem, size = 0x12000, scoped, tag = 'internal scratch']
  %s0 = inlined_call_operand.vmem [shape: f32[2,4,324], index: 0, kind: input, shape index: {}]
  %s1 = inlined_call_operand.vmem [shape: f32[8,4], index: 1, kind: input, shape index: {}]
  %s2 = inlined_call_operand.vmem [shape: f32[8,1], index: 2, kind: input, shape index: {}]
  %s3 = inlined_call_operand.vmem [shape: f32[2,8,324], index: 3, kind: input, shape index: {}, may-alias: {3,4}]
  %s4 = inlined_call_operand.vmem [shape: f32[2,8,324], index: 4, kind: output, shape index: {}, may-alias: {3,4}]
  %s5 = sld [smem:[#allocation0]]
  $region49: #{conv1x1_pad1_add.1} parent=0
    _
  %s7 = ssub.s32 1, %s5
  %s8 = scalar_select 0, %s7, %s5
  loop: start=0, step=1, limit=4
  $region2: #{conv1x1_pad1_add.1} parent=0 // loop_pre_header
    _
  $region3: #{conv1x1_pad1_add.1} parent=0 // loop_header
    %s10 = sphi 0, %s14
    %p11 = scmp.ge.s32.totalorder %s10, 4
    %s20 = sphi 0, %s22
    %s23 = sphi 0, %s20
    %s24 = sphi 0, %s23
    %s40 = sphi 0, %s24
    %s44 = sphi 0, %s44
    %s46 = sphi 0, %s44
    %s47 = sphi 0, %s46
    %s61 = sphi 0, %s47
    %s65 = sphi 0, %s65
    %s67 = sphi 0, %s65
    %s68 = sphi 0, %s67
    %s82 = sphi 0, %s68
    %s88 = sphi 0, %s90
    %s91 = sphi 0, %s88
    %s92 = sphi 0, %s91
    %s108 = sphi 0, %s92
    %s114 = sphi 0, %s116
    %s117 = sphi 0, %s114
    %s118 = sphi 0, %s117
    %s134 = sphi 0, %s118
  $region4: #{conv1x1_pad1_add.1} parent=0 // loop_header_branch
    %13 = sbr.rel (%p11) target = $region8
  $region5: #{conv1x1_pad1_add.1} parent=0 // loop_body
    %s15 = ssub.s32 %s10, 1
    %s16 = ssub.s32 %s10, 2
    %s17 = sadd.s32 %s10, 1
    %s18 = ssub.s32 %s10, %s17
    %p19 = scmp.eq.s32.totalorder %s18, 0
    %s21 = sadd.s32 %s20, 1
    %s22 = scalar_select %p19, %s20, %s21
    %p25 = pneg %p19
    %p26 = scmp.eq.s32.totalorder %s10, 1
    %p27 = por %p25, %p26
    %p28 = scmp.ne.s32.totalorder %s20, %s23
    %p29 = scmp.eq.s32.totalorder %s10, 0
    %p30 = por %p28, %p29
    %p31 = scmp.ne.s32.totalorder %s20, %s23
    %p32 = scmp.eq.s32.totalorder %s15, 1
    %p33 = por %p31, %p32
    %p34 = scmp.ne.s32.totalorder %s23, %s24
    %p35 = scmp.eq.s32.totalorder %s15, 0
    %p36 = por %p34, %p35
    %p37 = scmp.ne.s32.totalorder %s23, %s24
    %p38 = scmp.eq.s32.totalorder %s16, 1
    %p39 = por %p37, %p38
    %p41 = scmp.ne.s32.totalorder %s24, %s40
    %p42 = scmp.eq.s32.totalorder %s16, 0
    %p43 = por %p41, %p42
    %s45 = sadd.s32 %s44, 1
    %p48 = scmp.eq.s32.totalorder %s10, 1
    %p49 = scmp.ne.s32.totalorder %s44, %s46
    %p50 = scmp.eq.s32.totalorder %s10, 0
    %p51 = por %p49, %p50
    %p52 = scmp.ne.s32.totalorder %s44, %s46
    %p53 = scmp.eq.s32.totalorder %s15, 1
    %p54 = por %p52, %p53
    %p55 = scmp.ne.s32.totalorder %s46, %s47
    %p56 = scmp.eq.s32.totalorder %s15, 0
    %p57 = por %p55, %p56
    %p58 = scmp.ne.s32.totalorder %s46, %s47
    %p59 = scmp.eq.s32.totalorder %s16, 1
    %p60 = por %p58, %p59
    %p62 = scmp.ne.s32.totalorder %s47, %s61
    %p63 = scmp.eq.s32.totalorder %s16, 0
    %p64 = por %p62, %p63
    %s66 = sadd.s32 %s65, 1
    %p69 = scmp.eq.s32.totalorder %s10, 1
    %p70 = scmp.ne.s32.totalorder %s65, %s67
    %p71 = scmp.eq.s32.totalorder %s10, 0
    %p72 = por %p70, %p71
    %p73 = scmp.ne.s32.totalorder %s65, %s67
    %p74 = scmp.eq.s32.totalorder %s15, 1
    %p75 = por %p73, %p74
    %p76 = scmp.ne.s32.totalorder %s67, %s68
    %p77 = scmp.eq.s32.totalorder %s15, 0
    %p78 = por %p76, %p77
    %p79 = scmp.ne.s32.totalorder %s67, %s68
    %p80 = scmp.eq.s32.totalorder %s16, 1
    %p81 = por %p79, %p80
    %p83 = scmp.ne.s32.totalorder %s68, %s82
    %p84 = scmp.eq.s32.totalorder %s16, 0
    %p85 = por %p83, %p84
    %s86 = ssub.s32 %s10, %s17
    %p87 = scmp.eq.s32.totalorder %s86, 0
    %s89 = sadd.s32 %s88, 1
    %s90 = scalar_select %p87, %s88, %s89
    %p93 = pneg %p87
    %p94 = scmp.eq.s32.totalorder %s10, 1
    %p95 = por %p93, %p94
    %p96 = scmp.ne.s32.totalorder %s88, %s91
    %p97 = scmp.eq.s32.totalorder %s10, 0
    %p98 = por %p96, %p97
    %p99 = scmp.ne.s32.totalorder %s88, %s91
    %p100 = scmp.eq.s32.totalorder %s15, 1
    %p101 = por %p99, %p100
    %p102 = scmp.ne.s32.totalorder %s91, %s92
    %p103 = scmp.eq.s32.totalorder %s15, 0
    %p104 = por %p102, %p103
    %p105 = scmp.ne.s32.totalorder %s91, %s92
    %p106 = scmp.eq.s32.totalorder %s16, 1
    %p107 = por %p105, %p106
    %p109 = scmp.ne.s32.totalorder %s92, %s108
    %p110 = scmp.eq.s32.totalorder %s16, 0
    %p111 = por %p109, %p110
    %s112 = ssub.s32 %s10, %s17
    %p113 = scmp.eq.s32.totalorder %s112, 0
    %s115 = sadd.s32 %s114, 1
    %s116 = scalar_select %p113, %s114, %s115
    %p119 = pneg %p113
    %p120 = scmp.eq.s32.totalorder %s10, 1
    %p121 = por %p119, %p120
    %p122 = scmp.ne.s32.totalorder %s114, %s117
    %p123 = scmp.eq.s32.totalorder %s10, 0
    %p124 = por %p122, %p123
    %p125 = scmp.ne.s32.totalorder %s114, %s117
    %p126 = scmp.eq.s32.totalorder %s15, 1
    %p127 = por %p125, %p126
    %p128 = scmp.ne.s32.totalorder %s117, %s118
    %p129 = scmp.eq.s32.totalorder %s15, 0
    %p130 = por %p128, %p129
    %p131 = scmp.ne.s32.totalorder %s117, %s118
    %p132 = scmp.eq.s32.totalorder %s16, 1
    %p133 = por %p131, %p132
    %p135 = scmp.ne.s32.totalorder %s118, %s134
    %p136 = scmp.eq.s32.totalorder %s16, 0
    %p137 = por %p135, %p136
    %p138 = scmp.le.s32.totalorder 1, %s10
    %p139 = scmp.lt.s32.totalorder %s10, 3
    %p140 = pnand %p138, %p139
    %p141 = pneg %p140
    // Predicated region
    $region9: #{conv1x1_pad1_add.1} parent=5 // pred_check
      _
    $region10: #{conv1x1_pad1_add.1} parent=5 // pred_check_branch
      %143 = sbr.rel (%p140) target = $region12
    $region11: #{conv1x1_pad1_add.1} parent=5 // pred_region
      %s144 = ssub.s32 %s10, 1
      // Predicated region
      $region13: #{conv1x1_pad1_add.1} parent=11 // pred_check
        %p145 = pneg %p57
      $region14: #{conv1x1_pad1_add.1} parent=11 // pred_check_branch
        %147 = sbr.rel (%p145) target = $region16
      $region15: #{conv1x1_pad1_add.1} parent=11 // pred_region
        _
      $region16: #{conv1x1_pad1_add.1} parent=11 // pred_fallthru
        _
      // Predicated region
      $region17: #{conv1x1_pad1_add.1} parent=11 // pred_check
        %p148 = pneg %p78
      $region18: #{conv1x1_pad1_add.1} parent=11 // pred_check_branch
        %150 = sbr.rel (%p148) target = $region20
      $region19: #{conv1x1_pad1_add.1} parent=11 // pred_region
        _
      $region20: #{conv1x1_pad1_add.1} parent=11 // pred_fallthru
        _
    $region12: #{conv1x1_pad1_add.1} parent=5 // pred_fallthru
      _
    %p151 = scmp.lt.s32.totalorder %s10, 2
    // Predicated region
    $region21: #{conv1x1_pad1_add.1} parent=5 // pred_check
      %p152 = pneg %p151
    $region22: #{conv1x1_pad1_add.1} parent=5 // pred_check_branch
      %154 = sbr.rel (%p152) target = $region24
    $region23: #{conv1x1_pad1_add.1} parent=5 // pred_region
      // Predicated region
      $region25: #{conv1x1_pad1_add.1} parent=23 // pred_check
        %p155 = pneg %p30
      $region26: #{conv1x1_pad1_add.1} parent=23 // pred_check_branch
        %157 = sbr.rel (%p155) target = $region28
      $region27: #{conv1x1_pad1_add.1} parent=23 // pred_region
        %p158 = scmp.lt.s32.totalorder %s10, 1
        %s159 = scalar_select %p158, %s10, 1
        %s160 = smul.addr %s159, 3
        %s161 = smul.addr %s160, 4
        %s162 = scalar_lea.vmem %s0, %s161
      $region28: #{conv1x1_pad1_add.1} parent=23 // pred_fallthru
        _
      // Predicated region
      $region29: #{conv1x1_pad1_add.1} parent=23 // pred_check
        %p163 = pneg %p98
      $region30: #{conv1x1_pad1_add.1} parent=23 // pred_check_branch
        %165 = sbr.rel (%p163) target = $region32
      $region31: #{conv1x1_pad1_add.1} parent=23 // pred_region
        %p166 = scmp.lt.s32.totalorder %s10, 1
        %s167 = scalar_select %p166, %s10, 1
        %s168 = smul.addr %s167, 3
        %s169 = smul.addr %s168, 8
        %s170 = scalar_lea.vmem %s3, %s169
      $region32: #{conv1x1_pad1_add.1} parent=23 // pred_fallthru
        _
    $region24: #{conv1x1_pad1_add.1} parent=5 // pred_fallthru
      _
    %p171 = scmp.le.s32.totalorder 1, %s10
    %p172 = scmp.lt.s32.totalorder %s10, 3
    %p173 = pnand %p171, %p172
    %p174 = pneg %p173
    // Predicated region
    $region33: #{conv1x1_pad1_add.1} parent=5 // pred_check
      _
    $region34: #{conv1x1_pad1_add.1} parent=5 // pred_check_branch
      %176 = sbr.rel (%p173) target = $region36
    $region35: #{conv1x1_pad1_add.1} parent=5 // pred_region
      %s177 = ssub.s32 %s10, 1
      %p178 = scmp.lt.s32.totalorder %s15, 1
      %s179 = scalar_select %p178, %s15, 1
      %s180 = smul.addr %s179, 3
      %s181 = smul.addr %s180, 4
      %s182 = scalar_lea.vmem %s0, %s181
      %p183 = pneg %p36
      %p184 = pneg %p33
      %p185 = pneg %p57
      %p186 = pneg %p54
      %p187 = pneg %p78
      %p188 = pneg %p75
      %p189 = scmp.lt.s32.totalorder %s15, 1
      %s190 = scalar_select %p189, %s15, 1
      %s191 = smul.addr %s190, 3
      %s192 = smul.addr %s191, 8
      %s193 = scalar_lea.vmem %s3, %s192
      %p194 = pneg %p104
      %p195 = pneg %p101
      %p196 = pneg %p130
      %p197 = pneg %p127
      %p198 = scmp.lt.s32.totalorder %s15, 1
      %s199 = scalar_select %p198, %s15, 1
      %s200 = smul.addr %s199, 3
      %s201 = smul.addr %s200, 8
      %s202 = scalar_lea.vmem %s4, %s201
      %p203 = scmp.lt.s32.totalorder %s15, 1
      %s204 = scalar_select %p203, %s15, 1
      %s205 = smul.addr %s204, 3
      %s206 = smul.addr %s205, 4
      %s207 = scalar_lea.vmem %s0, %s206
      %p208 = scmp.lt.s32.totalorder %s15, 1
      %s209 = scalar_select %p208, %s15, 1
      %s210 = smul.addr %s209, 3
      %s211 = smul.addr %s210, 8
      %s212 = scalar_lea.vmem %s3, %s211
      %p213 = scmp.lt.s32.totalorder %s15, 1
      %s214 = scalar_select %p213, %s15, 1
      %s215 = smul.addr %s214, 3
      %s216 = smul.addr %s215, 8
      %s217 = scalar_lea.vmem %s4, %s216
      %v218 = vld [vmem:[%s1] sm:$0xff]
      %v219 = vld [vmem:[%s212] sm:$0xff]
      %v220 = vld [vmem:[%s212 + $0x8] sm:$0xff]
      %v221 = vld [vmem:[%s212 + $0x10] sm:$0xff]
      %v222 = vld [vmem:[%s2] sm:$0xff]
      %224 = vset.pattern.permute.xlu0 0
      %225 = vperm.xlu0 %224, %v222
      %v226 = vpop.permute.xlu0 %225
      %v228 = vadd.f32 %v219, %v226
      %v229 = vadd.f32 %v220, %v226
      %v230 = vadd.f32 %v221, %v226
      %v231 = vld [vmem:[%s207] ss:$4 sm:$0x7]
      %233 = vset.pattern.permute.xlu0 0
      %234 = vperm.xlu0 %233, %v218
      %v235 = vpop.permute.xlu0 %234
      %v238 = vlaneseq
      %v239 = vshrl.u32 %v238, 7
      %v240 = vsub.s32 0, %v239
      %v241 = vrot.slane %v231, %v240
      %v242 = vlaneseq
      %v243 = vshrl.u32 %v242, 7
      %v244 = vsub.s32 1, %v243
      %v245 = vrot.slane %v231, %v244
      %v246 = vlaneseq
      %v247 = vshrl.u32 %v246, 7
      %v248 = vsub.s32 2, %v247
      %v249 = vrot.slane %v231, %v248
      %v253 = vmul.f32 %v235, %v241
      %v254 = vmul.f32 %v235, %v245
      %v255 = vmul.f32 %v235, %v249
      %v256 = vadd.f32 %v228, %v253
      %v257 = vadd.f32 %v229, %v254
      %v258 = vadd.f32 %v230, %v255
      %s259 = scalar_lea.vmem %s207, 1
      %v260 = vld [vmem:[%s259] ss:$4 sm:$0x7]
      %261 = vset.pattern.permute.xlu0 1
      %262 = vperm.xlu0 %261, %v218
      %v263 = vpop.permute.xlu0 %262
      %v266 = vlaneseq
      %v267 = vshrl.u32 %v266, 7
      %v268 = vsub.s32 0, %v267
      %v269 = vrot.slane %v260, %v268
      %v270 = vlaneseq
      %v271 = vshrl.u32 %v270, 7
      %v272 = vsub.s32 1, %v271
      %v273 = vrot.slane %v260, %v272
      %v274 = vlaneseq
      %v275 = vshrl.u32 %v274, 7
      %v276 = vsub.s32 2, %v275
      %v277 = vrot.slane %v260, %v276
      %v281 = vmul.f32 %v263, %v269
      %v282 = vmul.f32 %v263, %v273
      %v283 = vmul.f32 %v263, %v277
      %v284 = vadd.f32 %v256, %v281
      %v285 = vadd.f32 %v257, %v282
      %v286 = vadd.f32 %v258, %v283
      %s287 = scalar_lea.vmem %s207, 2
      %v288 = vld [vmem:[%s287] ss:$4 sm:$0x7]
      %289 = vset.pattern.permute.xlu0 2
      %290 = vperm.xlu0 %289, %v218
      %v291 = vpop.permute.xlu0 %290
      %v294 = vlaneseq
      %v295 = vshrl.u32 %v294, 7
      %v296 = vsub.s32 0, %v295
      %v297 = vrot.slane %v288, %v296
      %v298 = vlaneseq
      %v299 = vshrl.u32 %v298, 7
      %v300 = vsub.s32 1, %v299
      %v301 = vrot.slane %v288, %v300
      %v302 = vlaneseq
      %v303 = vshrl.u32 %v302, 7
      %v304 = vsub.s32 2, %v303
      %v305 = vrot.slane %v288, %v304
      %v309 = vmul.f32 %v291, %v297
      %v310 = vmul.f32 %v291, %v301
      %v311 = vmul.f32 %v291, %v305
      %v312 = vadd.f32 %v284, %v309
      %v313 = vadd.f32 %v285, %v310
      %v314 = vadd.f32 %v286, %v311
      %s315 = scalar_lea.vmem %s207, 3
      %v316 = vld [vmem:[%s315] ss:$4 sm:$0x7]
      %317 = vset.pattern.permute.xlu0 3
      %318 = vperm.xlu0 %317, %v218
      %v319 = vpop.permute.xlu0 %318
      %v322 = vlaneseq
      %v323 = vshrl.u32 %v322, 7
      %v324 = vsub.s32 0, %v323
      %v325 = vrot.slane %v316, %v324
      %v326 = vlaneseq
      %v327 = vshrl.u32 %v326, 7
      %v328 = vsub.s32 1, %v327
      %v329 = vrot.slane %v316, %v328
      %v330 = vlaneseq
      %v331 = vshrl.u32 %v330, 7
      %v332 = vsub.s32 2, %v331
      %v333 = vrot.slane %v316, %v332
      %v337 = vmul.f32 %v319, %v325
      %v338 = vmul.f32 %v319, %v329
      %v339 = vmul.f32 %v319, %v333
      %v340 = vadd.f32 %v312, %v337
      %v341 = vadd.f32 %v313, %v338
      %v342 = vadd.f32 %v314, %v339
      %343 = vst [vmem:[%s217] sm:$0xff] %v340
      %344 = vst [vmem:[%s217 + $0x8] sm:$0xff] %v341
      %vm345 = vcmask 556032
      %346 = vst.msk [vmem:[%s217 + $0x10] sm:$0xff] %vm345, %v342
      %p347 = scmp.lt.s32.totalorder %s15, 1
      %s348 = scalar_select %p347, %s15, 1
      %s349 = smul.addr %s348, 3
      %s350 = smul.addr %s349, 8
      %s351 = scalar_lea.vmem %s4, %s350
      // Predicated region
      $region37: #{conv1x1_pad1_add.1} parent=35 // pred_check
        %p352 = pneg %p127
      $region38: #{conv1x1_pad1_add.1} parent=35 // pred_check_branch
        %354 = sbr.rel (%p352) target = $region40
      $region39: #{conv1x1_pad1_add.1} parent=35 // pred_region
        _
      $region40: #{conv1x1_pad1_add.1} parent=35 // pred_fallthru
        _
    $region36: #{conv1x1_pad1_add.1} parent=5 // pred_fallthru
      _
    %p355 = scmp.le.s32.totalorder 2, %s10
    // Predicated region
    $region41: #{conv1x1_pad1_add.1} parent=5 // pred_check
      %p356 = pneg %p355
    $region42: #{conv1x1_pad1_add.1} parent=5 // pred_check_branch
      %358 = sbr.rel (%p356) target = $region44
    $region43: #{conv1x1_pad1_add.1} parent=5 // pred_region
      %s359 = ssub.s32 %s10, 2
      // Predicated region
      $region45: #{conv1x1_pad1_add.1} parent=43 // pred_check
        %p360 = pneg %p133
      $region46: #{conv1x1_pad1_add.1} parent=43 // pred_check_branch
        %362 = sbr.rel (%p360) target = $region48
      $region47: #{conv1x1_pad1_add.1} parent=43 // pred_region
        %p363 = scmp.lt.s32.totalorder %s16, 1
        %s364 = scalar_select %p363, %s16, 1
        %s365 = smul.addr %s364, 3
        %s366 = smul.addr %s365, 8
        %s367 = scalar_lea.vmem %s4, %s366
      $region48: #{conv1x1_pad1_add.1} parent=43 // pred_fallthru
        _
    $region44: #{conv1x1_pad1_add.1} parent=5 // pred_fallthru
      _
  $region6: #{conv1x1_pad1_add.1} parent=0 // loop_footer
    %s14 = sadd.s32 1, %s10
  $region7: #{conv1x1_pad1_add.1} parent=0 // loop_footer_branch
    %9 = sbr.rel target = $region3
  $region8: #{conv1x1_pad1_add.1} parent=0 // loop_exit
    _

</llo_original>
